<compile_context>
chip_gen: v7x
topology: tpu7x:2x2x1
jax: 0.10.0
libtpu: 0.0.40
codegen_flags: <defaults>
</compile_context>

<pallas_src>
import math

import jax
import jax.numpy as jnp
from jax.experimental import pallas as pl
from jax.experimental.pallas import tpu as pltpu


# ----------------------------------------------------------------------------- #
# Fused Pallas kernel: gates + MLPs (both modalities) + centering + covariances
# ----------------------------------------------------------------------------- #
def _fused_sdcca_kernel(x_ref, y_ref, mux_ref, muy_ref,
                        w1x_ref, b1x_ref, w2x_ref, b2x_ref,
                        w1y_ref, b1y_ref, w2y_ref, b2y_ref,
                        cov_ref):
    """Everything up to (and including) the covariance matrices in one invocation.

    cov_ref is a packed (d, 3d) slab: [ C_xx | C_yy | C_xy ].
    """
    n = x_ref.shape[0]
    d = w2x_ref.shape[1]

    def modality(x, mu, w1, b1, w2, b2):
        # StochasticGates (eval mode): z = hard_sigmoid(mu + 0.5) = clamp(mu+0.5, 0, 1)
        # TODO(synk): training-mode gate noise (mu + sigma*randn) omitted; deterministic
        #             eval-mode forward is implemented.
        z = jnp.clip(mu + 0.5, 0.0, 1.0)                                 # (1, D)
        xg = x * z                                                       # (N, D)
        h = jnp.tanh(
            jnp.dot(xg, w1, preferred_element_type=jnp.float32) + b1     # (N, H)
        )
        return jnp.dot(h, w2, preferred_element_type=jnp.float32) + b2   # (N, d)

    x_hat = modality(x_ref[...], mux_ref[...], w1x_ref[...], b1x_ref[...],
                     w2x_ref[...], b2x_ref[...])
    y_hat = modality(y_ref[...], muy_ref[...], w1y_ref[...], b1y_ref[...],
                     w2y_ref[...], b2y_ref[...])

    psi_x = x_hat - jnp.mean(x_hat, axis=0, keepdims=True)
    psi_y = y_hat - jnp.mean(y_hat, axis=0, keepdims=True)

    inv_nm1 = 1.0 / (n - 1)

    def covT(a, b):
        # PyTorch _cov(A, B) = (B.T @ A).T / (N - 1) == (A.T @ B) / (N - 1)
        return jax.lax.dot_general(
            a, b, (((0,), (0,)), ((), ())), preferred_element_type=jnp.float32
        ) * inv_nm1

    cov_ref[:, 0:d]         = covT(psi_x, psi_x)    # C_xx
    cov_ref[:, d:2 * d]     = covT(psi_y, psi_y)    # C_yy
    cov_ref[:, 2 * d:3 * d] = covT(psi_x, psi_y)    # C_xy  (C_yx == C_xy.T)


_VMEM = pl.BlockSpec(memory_space=pltpu.MemorySpace.VMEM)


def fused_cov_stats(X, Y, params):
    """One pallas_call; returns (C_xx, C_yy, C_xy) sliced from the packed slab."""
    # NOTE: at toy sizes everything is whole-array-resident in VMEM (a few KB).
    # TODO(synk): for large N, grid over samples with VMEM covariance accumulators
    #             (pl.when init/finalize, reduction axis "arbitrary") and bf16
    #             matmul casts; not needed at these shapes.
    d = params["w2x"].shape[1]
    packed = pl.pallas_call(
        _fused_sdcca_kernel,
        out_shape=jax.ShapeDtypeStruct((d, 3 * d), jnp.float32),
        in_specs=[_VMEM] * 12,
        out_specs=_VMEM,
    )(X, Y,
      params["mu_x"], params["mu_y"],
      params["w1x"], params["b1x"], params["w2x"], params["b2x"],
      params["w1y"], params["b1y"], params["w2y"], params["b2y"])
    return packed[:, :d], packed[:, d:2 * d], packed[:, 2 * d:]


# ----------------------------------------------------------------------------- #
# Plain-JAX glue (inside the same jit): spectral tail + gate regularizer
# ----------------------------------------------------------------------------- #
def _mat_inv_sqrt(a):
    # TODO(synk): torch.linalg.eig (general complex eig) has no TPU/Pallas lowering;
    # the input is symmetric PSD so eigh gives the same real decomposition, and its
    # eigenvectors are orthonormal so inv(V) == V.T (drops an extra matrix inverse).
    w, v = jnp.linalg.eigh(a)
    return (v * (w + 0.001) ** (-0.5)) @ v.T


def _gate_reg(mu, lam, sigma):
    # StochasticGates regularizer: lam * sum( Phi((mu + 0.5) / sigma) ),
    # Phi(t) = 0.5 * (1 + erf(t / sqrt(2)))  (standard STG formulation).
    # TODO(synk): erf has no confirmed Mosaic lowering, so this stays in plain JAX
    #             (fused into the same jit region, so no extra host dispatch).
    t = (mu + 0.5) / (sigma * math.sqrt(2.0))
    return lam * jnp.sum(0.5 * (1.0 + jax.scipy.special.erf(t)))


def sparse_deep_cca_forward(X, Y, params, lamx, lamy, sigmax, sigmay):
    c_xx, c_yy, c_xy = fused_cov_stats(X, Y, params)
    c_yx = c_xy.T   # mathematically identical to the reference's fourth matmul

    d = c_xx.shape[0]
    eye = jnp.eye(d, dtype=jnp.float32)

    # NOTE: the PyTorch reference applies the 1e-3 regularizer twice for C_yy
    # (once on the matrix, once on the eigenvalues inside _mat_to_the_power);
    # reproduced exactly here.
    c_yy_inv_root = _mat_inv_sqrt(c_yy + eye * 0.001)
    c_xx_inv = jnp.linalg.inv(c_xx + eye * 0.001)

    m = c_yy_inv_root @ c_yx @ c_xx_inv @ c_xy @ c_yy_inv_root
    corr = jnp.trace(m) / d

    reg = _gate_reg(params["mu_x"], lamx, sigmax) + _gate_reg(params["mu_y"], lamy, sigmay)
    return -corr + reg


# ----------------------------------------------------------------------------- #
# Pure-JAX reference for the Pallas-covered part (correctness check only)
# ----------------------------------------------------------------------------- #
def _reference_cov(X, Y, params):
    hp = jax.lax.Precision.HIGHEST

    def modality(x, mu, w1, b1, w2, b2):
        z = jnp.clip(mu + 0.5, 0.0, 1.0)
        h = jnp.tanh(jnp.dot(x * z, w1, precision=hp) + b1)
        return jnp.dot(h, w2, precision=hp) + b2

    x_hat = modality(X, params["mu_x"], params["w1x"], params["b1x"],
                     params["w2x"], params["b2x"])
    y_hat = modality(Y, params["mu_y"], params["w1y"], params["b1y"],
                     params["w2y"], params["b2y"])
    psi_x = x_hat - x_hat.mean(0, keepdims=True)
    psi_y = y_hat - y_hat.mean(0, keepdims=True)
    n = X.shape[0]
    cxx = jnp.dot(psi_x.T, psi_x, precision=hp) / (n - 1)
    cyy = jnp.dot(psi_y.T, psi_y, precision=hp) / (n - 1)
    cxy = jnp.dot(psi_x.T, psi_y, precision=hp) / (n - 1)
    return cxx, cyy, cxy


# ----------------------------------------------------------------------------- #
# Main
# ----------------------------------------------------------------------------- #
if __name__ == "__main__":
    # Small shapes consistent with the module: N samples, Dx/Dy features,
    # MLP hidden H, shared CCA embedding dim d.
    N, DX, DY, H, D_OUT = 16, 32, 24, 32, 8
    LAMX, LAMY = 0.1, 0.1
    SIGMAX, SIGMAY = 1.0, 1.0

    key = jax.random.PRNGKey(0)
    keys = jax.random.split(key, 12)

    def init_linear(kw, kb, fan_in, fan_out):
        bound = 1.0 / math.sqrt(fan_in)
        w = jax.random.uniform(kw, (fan_in, fan_out), jnp.float32, -bound, bound)
        b = jax.random.uniform(kb, (1, fan_out), jnp.float32, -bound, bound)
        return w, b

    w1x, b1x = init_linear(keys[0], keys[1], DX, H)
    w2x, b2x = init_linear(keys[2], keys[3], H, D_OUT)
    w1y, b1y = init_linear(keys[4], keys[5], DY, H)
    w2y, b2y = init_linear(keys[6], keys[7], H, D_OUT)

    params = {
        "mu_x": jnp.zeros((1, DX), jnp.float32),   # gates init -> z = 0.5
        "mu_y": jnp.zeros((1, DY), jnp.float32),
        "w1x": w1x, "b1x": b1x, "w2x": w2x, "b2x": b2x,
        "w1y": w1y, "b1y": b1y, "w2y": w2y, "b2y": b2y,
    }

    X = jax.random.normal(keys[8], (N, DX), jnp.float32)
    Y = jax.random.normal(keys[9], (N, DY), jnp.float32)

    # Correctness check of the fused Pallas kernel against a pure-JAX reference.
    pallas_covs = jax.block_until_ready(fused_cov_stats(X, Y, params))
    ref_covs = _reference_cov(X, Y, params)
    for got, want in zip(pallas_covs, ref_covs):
        assert jnp.allclose(got, want, atol=2e-3, rtol=2e-3), "covariance mismatch"

    # Full forward (one jit region: fused kernel + spectral tail + regularizer).
    forward = jax.jit(sparse_deep_cca_forward)
    loss = forward(X, Y, params, LAMX, LAMY, SIGMAX, SIGMAY)
    loss = jax.block_until_ready(loss)
    assert jnp.isfinite(loss), f"non-finite loss: {loss}"
    print("KERNEL_OK")
</pallas_src>

<mosaic_0001>
module attributes {stable_mosaic.version = 11 : i64} {
  func.func @_fused_sdcca_kernel(%arg0: memref<16x32xf32, #tpu.memory_space<vmem>>, %arg1: memref<16x24xf32, #tpu.memory_space<vmem>>, %arg2: memref<1x32xf32, #tpu.memory_space<vmem>>, %arg3: memref<1x24xf32, #tpu.memory_space<vmem>>, %arg4: memref<32x32xf32, #tpu.memory_space<vmem>>, %arg5: memref<1x32xf32, #tpu.memory_space<vmem>>, %arg6: memref<32x8xf32, #tpu.memory_space<vmem>>, %arg7: memref<1x8xf32, #tpu.memory_space<vmem>>, %arg8: memref<24x32xf32, #tpu.memory_space<vmem>>, %arg9: memref<1x32xf32, #tpu.memory_space<vmem>>, %arg10: memref<32x8xf32, #tpu.memory_space<vmem>>, %arg11: memref<1x8xf32, #tpu.memory_space<vmem>>, %arg12: memref<8x24xf32, #tpu.memory_space<vmem>>) attributes {dimension_semantics = [], scalar_prefetch = 0 : i64, scratch_operands = 0 : i64, tpu.core_type = #tpu.core_type<tc>} {
    %c0 = arith.constant 0 : index
    %c0_0 = arith.constant 0 : index
    %0 = vector.load %arg0[%c0, %c0_0] : memref<16x32xf32, #tpu.memory_space<vmem>>, vector<16x32xf32>
    %c0_1 = arith.constant 0 : index
    %c0_2 = arith.constant 0 : index
    %1 = vector.load %arg2[%c0_1, %c0_2] : memref<1x32xf32, #tpu.memory_space<vmem>>, vector<1x32xf32>
    %c0_3 = arith.constant 0 : index
    %c0_4 = arith.constant 0 : index
    %2 = vector.load %arg4[%c0_3, %c0_4] : memref<32x32xf32, #tpu.memory_space<vmem>>, vector<32x32xf32>
    %c0_5 = arith.constant 0 : index
    %c0_6 = arith.constant 0 : index
    %3 = vector.load %arg5[%c0_5, %c0_6] : memref<1x32xf32, #tpu.memory_space<vmem>>, vector<1x32xf32>
    %c0_7 = arith.constant 0 : index
    %c0_8 = arith.constant 0 : index
    %4 = vector.load %arg6[%c0_7, %c0_8] : memref<32x8xf32, #tpu.memory_space<vmem>>, vector<32x8xf32>
    %c0_9 = arith.constant 0 : index
    %c0_10 = arith.constant 0 : index
    %5 = vector.load %arg7[%c0_9, %c0_10] : memref<1x8xf32, #tpu.memory_space<vmem>>, vector<1x8xf32>
    %cst = arith.constant 5.000000e-01 : f32
    %6 = vector.broadcast %cst : f32 to vector<1x32xf32>
    %7 = arith.addf %1, %6 : vector<1x32xf32>
    %cst_11 = arith.constant 0.000000e+00 : f32
    %cst_12 = arith.constant 1.000000e+00 : f32
    %8 = vector.broadcast %cst_11 : f32 to vector<1x32xf32>
    %9 = arith.maximumf %8, %7 : vector<1x32xf32>
    %10 = vector.broadcast %cst_12 : f32 to vector<1x32xf32>
    %11 = arith.minimumf %10, %9 : vector<1x32xf32>
    %12 = vector.broadcast %11 : vector<1x32xf32> to vector<16x32xf32>
    %13 = arith.mulf %0, %12 : vector<16x32xf32>
    %cst_13 = arith.constant dense<0.000000e+00> : vector<16x32xf32>
    %14 = tpu.matmul %13, %2, %cst_13 {dimension_numbers = #tpu.dot_dimension_numbers<[1], [0], [0], [1], [0, 0, 1, 1], [], []>} : vector<16x32xf32>, vector<32x32xf32>, vector<16x32xf32> -> vector<16x32xf32>
    %15 = vector.broadcast %3 : vector<1x32xf32> to vector<16x32xf32>
    %16 = arith.addf %14, %15 : vector<16x32xf32>
    %17 = math.tanh %16 : vector<16x32xf32>
    %cst_14 = arith.constant dense<0.000000e+00> : vector<16x8xf32>
    %18 = tpu.matmul %17, %4, %cst_14 {dimension_numbers = #tpu.dot_dimension_numbers<[1], [0], [0], [1], [0, 0, 1, 1], [], []>} : vector<16x32xf32>, vector<32x8xf32>, vector<16x8xf32> -> vector<16x8xf32>
    %19 = vector.broadcast %5 : vector<1x8xf32> to vector<16x8xf32>
    %20 = arith.addf %18, %19 : vector<16x8xf32>
    %c0_15 = arith.constant 0 : index
    %c0_16 = arith.constant 0 : index
    %21 = vector.load %arg1[%c0_15, %c0_16] : memref<16x24xf32, #tpu.memory_space<vmem>>, vector<16x24xf32>
    %c0_17 = arith.constant 0 : index
    %c0_18 = arith.constant 0 : index
    %22 = vector.load %arg3[%c0_17, %c0_18] : memref<1x24xf32, #tpu.memory_space<vmem>>, vector<1x24xf32>
    %c0_19 = arith.constant 0 : index
    %c0_20 = arith.constant 0 : index
    %23 = vector.load %arg8[%c0_19, %c0_20] : memref<24x32xf32, #tpu.memory_space<vmem>>, vector<24x32xf32>
    %c0_21 = arith.constant 0 : index
    %c0_22 = arith.constant 0 : index
    %24 = vector.load %arg9[%c0_21, %c0_22] : memref<1x32xf32, #tpu.memory_space<vmem>>, vector<1x32xf32>
    %c0_23 = arith.constant 0 : index
    %c0_24 = arith.constant 0 : index
    %25 = vector.load %arg10[%c0_23, %c0_24] : memref<32x8xf32, #tpu.memory_space<vmem>>, vector<32x8xf32>
    %c0_25 = arith.constant 0 : index
    %c0_26 = arith.constant 0 : index
    %26 = vector.load %arg11[%c0_25, %c0_26] : memref<1x8xf32, #tpu.memory_space<vmem>>, vector<1x8xf32>
    %cst_27 = arith.constant 5.000000e-01 : f32
    %27 = vector.broadcast %cst_27 : f32 to vector<1x24xf32>
    %28 = arith.addf %22, %27 : vector<1x24xf32>
    %cst_28 = arith.constant 0.000000e+00 : f32
    %cst_29 = arith.constant 1.000000e+00 : f32
    %29 = vector.broadcast %cst_28 : f32 to vector<1x24xf32>
    %30 = arith.maximumf %29, %28 : vector<1x24xf32>
    %31 = vector.broadcast %cst_29 : f32 to vector<1x24xf32>
    %32 = arith.minimumf %31, %30 : vector<1x24xf32>
    %33 = vector.broadcast %32 : vector<1x24xf32> to vector<16x24xf32>
    %34 = arith.mulf %21, %33 : vector<16x24xf32>
    %cst_30 = arith.constant dense<0.000000e+00> : vector<16x32xf32>
    %35 = tpu.matmul %34, %23, %cst_30 {dimension_numbers = #tpu.dot_dimension_numbers<[1], [0], [0], [1], [0, 0, 1, 1], [], []>} : vector<16x24xf32>, vector<24x32xf32>, vector<16x32xf32> -> vector<16x32xf32>
    %36 = vector.broadcast %24 : vector<1x32xf32> to vector<16x32xf32>
    %37 = arith.addf %35, %36 : vector<16x32xf32>
    %38 = math.tanh %37 : vector<16x32xf32>
    %cst_31 = arith.constant dense<0.000000e+00> : vector<16x8xf32>
    %39 = tpu.matmul %38, %25, %cst_31 {dimension_numbers = #tpu.dot_dimension_numbers<[1], [0], [0], [1], [0, 0, 1, 1], [], []>} : vector<16x32xf32>, vector<32x8xf32>, vector<16x8xf32> -> vector<16x8xf32>
    %40 = vector.broadcast %26 : vector<1x8xf32> to vector<16x8xf32>
    %41 = arith.addf %39, %40 : vector<16x8xf32>
    %cst_32 = arith.constant dense<0.000000e+00> : vector<8xf32>
    %42 = vector.multi_reduction <add>, %20, %cst_32 [0] : vector<16x8xf32> to vector<8xf32>
    %43 = vector.shape_cast %42 : vector<8xf32> to vector<1x8xf32>
    %cst_33 = arith.constant 1.600000e+01 : f32
    %44 = vector.broadcast %cst_33 : f32 to vector<1x8xf32>
    %45 = arith.divf %43, %44 : vector<1x8xf32>
    %46 = vector.broadcast %45 : vector<1x8xf32> to vector<16x8xf32>
    %47 = arith.subf %20, %46 : vector<16x8xf32>
    %cst_34 = arith.constant dense<0.000000e+00> : vector<8xf32>
    %48 = vector.multi_reduction <add>, %41, %cst_34 [0] : vector<16x8xf32> to vector<8xf32>
    %49 = vector.shape_cast %48 : vector<8xf32> to vector<1x8xf32>
    %cst_35 = arith.constant 1.600000e+01 : f32
    %50 = vector.broadcast %cst_35 : f32 to vector<1x8xf32>
    %51 = arith.divf %49, %50 : vector<1x8xf32>
    %52 = vector.broadcast %51 : vector<1x8xf32> to vector<16x8xf32>
    %53 = arith.subf %41, %52 : vector<16x8xf32>
    %cst_36 = arith.constant dense<0.000000e+00> : vector<8x8xf32>
    %54 = tpu.matmul %47, %47, %cst_36 {dimension_numbers = #tpu.dot_dimension_numbers<[0], [0], [1], [1], [0, 1, 1, 1], [], []>} : vector<16x8xf32>, vector<16x8xf32>, vector<8x8xf32> -> vector<8x8xf32>
    %cst_37 = arith.constant 0.0666666701 : f32
    %55 = vector.broadcast %cst_37 : f32 to vector<8x8xf32>
    %56 = arith.mulf %54, %55 : vector<8x8xf32>
    %c0_38 = arith.constant 0 : index
    %c0_39 = arith.constant 0 : index
    %57 = vector.load %arg12[%c0_38, %c0_39] : memref<8x24xf32, #tpu.memory_space<vmem>>, vector<8x8xf32>
    tpu.vector_store %arg12[%c0_38, %c0_39], %56 {strides = array<i32>} : memref<8x24xf32, #tpu.memory_space<vmem>>, vector<8x8xf32>,
    %cst_40 = arith.constant dense<0.000000e+00> : vector<8x8xf32>
    %58 = tpu.matmul %53, %53, %cst_40 {dimension_numbers = #tpu.dot_dimension_numbers<[0], [0], [1], [1], [0, 1, 1, 1], [], []>} : vector<16x8xf32>, vector<16x8xf32>, vector<8x8xf32> -> vector<8x8xf32>
    %cst_41 = arith.constant 0.0666666701 : f32
    %59 = vector.broadcast %cst_41 : f32 to vector<8x8xf32>
    %60 = arith.mulf %58, %59 : vector<8x8xf32>
    %c0_42 = arith.constant 0 : index
    %c8 = arith.constant 8 : index
    %61 = vector.load %arg12[%c0_42, %c8] : memref<8x24xf32, #tpu.memory_space<vmem>>, vector<8x8xf32>
    tpu.vector_store %arg12[%c0_42, %c8], %60 {strides = array<i32>} : memref<8x24xf32, #tpu.memory_space<vmem>>, vector<8x8xf32>,
    %cst_43 = arith.constant dense<0.000000e+00> : vector<8x8xf32>
    %62 = tpu.matmul %47, %53, %cst_43 {dimension_numbers = #tpu.dot_dimension_numbers<[0], [0], [1], [1], [0, 1, 1, 1], [], []>} : vector<16x8xf32>, vector<16x8xf32>, vector<8x8xf32> -> vector<8x8xf32>
    %cst_44 = arith.constant 0.0666666701 : f32
    %63 = vector.broadcast %cst_44 : f32 to vector<8x8xf32>
    %64 = arith.mulf %62, %63 : vector<8x8xf32>
    %c0_45 = arith.constant 0 : index
    %c16 = arith.constant 16 : index
    %65 = vector.load %arg12[%c0_45, %c16] : memref<8x24xf32, #tpu.memory_space<vmem>>, vector<8x8xf32>
    tpu.vector_store %arg12[%c0_45, %c16], %64 {strides = array<i32>} : memref<8x24xf32, #tpu.memory_space<vmem>>, vector<8x8xf32>,
    return
  }
}

</mosaic_0001>

<llo_original>
// kernel: tpu_custom_call.1
$region0: #{tpu_custom_call.1}
  #allocation0 [shape = 'u32[]', space=smem, size = 0x4, offset = 0x4, fixed_abs, tag = 'smem constant byte address 0x4 - core index']
  #allocation1 [shape = 'u32[144,128]{1,0:T(1,128)}', space=vmem, size = 0x12000, scoped, tag = 'internal scratch']
  %s0 = inlined_call_operand.vmem [shape: f32[16,32], index: 0, kind: input, shape index: {}]
  %s1 = inlined_call_operand.hbm [shape: f32[16,24], index: 1, kind: input, shape index: {}]
  %s2 = inlined_call_operand.vmem [shape: f32[1,32], index: 2, kind: input, shape index: {}]
  %s3 = inlined_call_operand.vmem [shape: f32[1,24], index: 3, kind: input, shape index: {}]
  %s4 = inlined_call_operand.vmem [shape: f32[32,32], index: 4, kind: input, shape index: {}]
  %s5 = inlined_call_operand.vmem [shape: f32[1,32], index: 5, kind: input, shape index: {}]
  %s6 = inlined_call_operand.vmem [shape: f32[32,8], index: 6, kind: input, shape index: {}]
  %s7 = inlined_call_operand.vmem [shape: f32[1,8], index: 7, kind: input, shape index: {}]
  %s8 = inlined_call_operand.vmem [shape: f32[24,32], index: 8, kind: input, shape index: {}]
  %s9 = inlined_call_operand.vmem [shape: f32[1,32], index: 9, kind: input, shape index: {}]
  %s10 = inlined_call_operand.vmem [shape: f32[32,8], index: 10, kind: input, shape index: {}]
  %s11 = inlined_call_operand.vmem [shape: f32[1,8], index: 11, kind: input, shape index: {}]
  %s12 = inlined_call_operand.hbm [shape: f32[8,24], index: 12, kind: output, shape index: {}]
  %s13 = sld [smem:[#allocation0]]
  $region62: #{tpu_custom_call.1} parent=0
    _
  %s15 = ssub.s32 1, %s13
  %s16 = scalar_select 0, %s15, %s13
  $region1: #{tpu_custom_call.1} parent=0
    #allocation2 [shape = 'u8[8192]{0}', space=vmem, size = 0x2000, scoped, tag = 'input window, operand 1, single buffered']
    #allocation3 [shape = 's32[1]{0}', space=sflag, size = 0x4, scoped, tag = 'scoped memory for tpu_custom_call.1']
    #allocation4 [shape = 's32[1]{0}', space=sflag, size = 0x4, scoped, tag = 'scoped memory for tpu_custom_call.1']
    #allocation5 [shape = 'u8[4096]{0}', space=vmem, size = 0x1000, scoped, tag = 'output window, operand 0, single buffered']
    %17 = vsyncpa [#allocation3], 0
    %18 = vsyncpa [#allocation4], 0
    // Predicated region
    $region2: #{tpu_custom_call.1} parent=1 // pred_check
      _
    $region3: #{tpu_custom_call.1} parent=1 // pred_check_branch
      %20 = sbr.rel (0) target = $region5
    $region4: #{tpu_custom_call.1} parent=1 // pred_region
      _
    $region5: #{tpu_custom_call.1} parent=1 // pred_fallthru
      _
    // Predicated region
    $region6: #{tpu_custom_call.1} parent=1 // pred_check
      _
    $region7: #{tpu_custom_call.1} parent=1 // pred_check_branch
      %22 = sbr.rel (0) target = $region9
    $region8: #{tpu_custom_call.1} parent=1 // pred_region
      %s24 = ssub.s32 256, 256
      %25 = vsyncadd [#allocation3], %s24
      %s26 = sshll.u32 [#allocation2], 4
      %s27 = int_to_ptr.vmem [resolvable:$true] %s26
      %32 = dma.hbm_to_vmem [thread:$0]  %s1, 256, %s27, [#allocation3], 128, 128, 8
    $region9: #{tpu_custom_call.1} parent=1 // pred_fallthru
      _
    // Predicated region
    $region10: #{tpu_custom_call.1} parent=1 // pred_check
      _
    $region11: #{tpu_custom_call.1} parent=1 // pred_check_branch
      %34 = sbr.rel (0) target = $region13
    $region12: #{tpu_custom_call.1} parent=1 // pred_region
      _
    $region13: #{tpu_custom_call.1} parent=1 // pred_fallthru
      _
    // Predicated region
    $region14: #{tpu_custom_call.1} parent=1 // pred_check
      _
    $region15: #{tpu_custom_call.1} parent=1 // pred_check_branch
      %36 = sbr.rel (0) target = $region17
    $region16: #{tpu_custom_call.1} parent=1 // pred_region
      _
    $region17: #{tpu_custom_call.1} parent=1 // pred_fallthru
      _
    // Predicated region
    $region18: #{tpu_custom_call.1} parent=1 // pred_check
      _
    $region19: #{tpu_custom_call.1} parent=1 // pred_check_branch
      %38 = sbr.rel (0) target = $region21
    $region20: #{tpu_custom_call.1} parent=1 // pred_region
      _
    $region21: #{tpu_custom_call.1} parent=1 // pred_fallthru
      _
    // Predicated region
    $region22: #{tpu_custom_call.1} parent=1 // pred_check
      _
    $region23: #{tpu_custom_call.1} parent=1 // pred_check_branch
      %40 = sbr.rel (0) target = $region25
    $region24: #{tpu_custom_call.1} parent=1 // pred_region
      _
    $region25: #{tpu_custom_call.1} parent=1 // pred_fallthru
      _
    // Predicated region
    $region26: #{tpu_custom_call.1} parent=1 // pred_check
      _
    $region27: #{tpu_custom_call.1} parent=1 // pred_check_branch
      %42 = sbr.rel (0) target = $region29
    $region28: #{tpu_custom_call.1} parent=1 // pred_region
      _
    $region29: #{tpu_custom_call.1} parent=1 // pred_fallthru
      _
    // Predicated region
    $region30: #{tpu_custom_call.1} parent=1 // pred_check
      _
    $region31: #{tpu_custom_call.1} parent=1 // pred_check_branch
      %44 = sbr.rel (0) target = $region33
    $region32: #{tpu_custom_call.1} parent=1 // pred_region
      _
    $region33: #{tpu_custom_call.1} parent=1 // pred_fallthru
      _
    // Predicated region
    $region34: #{tpu_custom_call.1} parent=1 // pred_check
      _
    $region35: #{tpu_custom_call.1} parent=1 // pred_check_branch
      %46 = sbr.rel (0) target = $region37
    $region36: #{tpu_custom_call.1} parent=1 // pred_region
      _
    $region37: #{tpu_custom_call.1} parent=1 // pred_fallthru
      _
    // Predicated region
    $region38: #{tpu_custom_call.1} parent=1 // pred_check
      _
    $region39: #{tpu_custom_call.1} parent=1 // pred_check_branch
      %48 = sbr.rel (0) target = $region41
    $region40: #{tpu_custom_call.1} parent=1 // pred_region
      _
    $region41: #{tpu_custom_call.1} parent=1 // pred_fallthru
      _
    // Predicated region
    $region42: #{tpu_custom_call.1} parent=1 // pred_check
      _
    $region43: #{tpu_custom_call.1} parent=1 // pred_check_branch
      %50 = sbr.rel (0) target = $region45
    $region44: #{tpu_custom_call.1} parent=1 // pred_region
      _
    $region45: #{tpu_custom_call.1} parent=1 // pred_fallthru
      _
    // Predicated region
    $region46: #{tpu_custom_call.1} parent=1 // pred_check
      _
    $region47: #{tpu_custom_call.1} parent=1 // pred_check_branch
      %52 = sbr.rel (0) target = $region49
    $region48: #{tpu_custom_call.1} parent=1 // pred_region
      _
    $region49: #{tpu_custom_call.1} parent=1 // pred_fallthru
      _
    // Predicated region
    $region50: #{tpu_custom_call.1} parent=1 // pred_check
      _
    $region51: #{tpu_custom_call.1} parent=1 // pred_check_branch
      %54 = sbr.rel (0) target = $region53
    $region52: #{tpu_custom_call.1} parent=1 // pred_region
      %55 = dma.done [#allocation3], 256
    $region53: #{tpu_custom_call.1} parent=1 // pred_fallthru
      _
    %v56 = vld [vmem:[%s0] sm:$0xff]
    %v57 = vld [vmem:[%s0 + $0x8] sm:$0xff]
    %v58 = vld [vmem:[%s2] sm:$0x1]
    %v59 = vld [vmem:[%s4] sm:$0xff]
    %v60 = vld [vmem:[%s4 + $0x8] sm:$0xff]
    %v61 = vld [vmem:[%s4 + $0x10] sm:$0xff]
    %v62 = vld [vmem:[%s4 + $0x18] sm:$0xff]
    %v63 = vld [vmem:[%s5] sm:$0x1]
    %v64 = vld [vmem:[%s6] sm:$0xff]
    %v65 = vld [vmem:[%s6 + $0x8] sm:$0xff]
    %v66 = vld [vmem:[%s6 + $0x10] sm:$0xff]
    %v67 = vld [vmem:[%s6 + $0x18] sm:$0xff]
    %v68 = vld [vmem:[%s7] sm:$0x1]
    %v69 = vadd.f32 %v58, 0.5
    %v70 = vmax.f32 %v69, 0.0
    %v71 = vmin.f32 %v70, 1.0
    %v73 = vlaneseq
    %v74 = vshrl.u32 %v73, 7
    %v75 = vsub.s32 0, %v74
    %v76 = vrot.slane %v71, %v75
    %v78 = vmul.f32 %v56, %v76
    %v79 = vmul.f32 %v57, %v76
    %v81 = vlaneseq
    %v82 = vshrl.u32 %v81, 7
    %v83 = vsub.s32 0, %v82
    %v84 = vrot.slane %v63, %v83
    %vm86 = vcmask 261120
    %v88 = vsel %vm86, %v78, 0
    %v91 = vsel %vm86, %v79, 0
    %93 = vmatprep.subr.mxu0 0.0
    %94 = vmatpush1.msra.mxu0 %v59
    %95 = vmatprep.subr.mxu0 0.0
    %96 = vmatpush1.msra.mxu0 %v60
    %97 = vmatprep.subr.mxu0 0.0
    %98 = vmatpush1.msra.mxu0 %v61
    %99 = vmatprep.subr.mxu0 0.0
    %100 = vmatpush1.msra.mxu0 %v62
    %101 = vmatprep.subr.mxu0 0.0
    %102 = vmatpush1.msra.mxu0 0.0
    %103 = vmatprep.subr.mxu0 0.0
    %104 = vmatpush1.msra.mxu0 0.0
    %105 = vmatprep.subr.mxu0 0.0
    %106 = vmatpush1.msra.mxu0 0.0
    %107 = vmatprep.subr.mxu0 0.0
    %108 = vmatpush1.msra.mxu0 0.0
    %109 = vmatprep.subr.mxu0 0.0
    %110 = vmatpush1.msra.mxu0 0.0
    %111 = vmatprep.subr.mxu0 0.0
    %112 = vmatpush1.msra.mxu0 0.0
    %113 = vmatprep.subr.mxu0 0.0
    %114 = vmatpush1.msra.mxu0 0.0
    %115 = vmatprep.subr.mxu0 0.0
    %116 = vmatpush1.msra.mxu0 0.0
    %117 = vmatprep.subr.mxu0 0.0
    %118 = vmatpush1.msra.mxu0 0.0
    %119 = vmatprep.subr.mxu0 0.0
    %120 = vmatpush1.msra.mxu0 0.0
    %121 = vmatprep.subr.mxu0 0.0
    %122 = vmatpush1.msra.mxu0 0.0
    %123 = vmatprep.subr.mxu0 0.0
    %124 = vmatpush1.msra.mxu0 0.0
    %125 = vmatprep.subr.mxu0 0.0
    %126 = vmatpush1.msra.mxu0 0.0
    %127 = vmatprep.subr.mxu0 0.0
    %128 = vmatpush1.msra.mxu0 0.0
    %129 = vmatprep.subr.mxu0 0.0
    %130 = vmatpush1.msra.mxu0 0.0
    %131 = vmatprep.subr.mxu0 0.0
    %132 = vmatpush1.msra.mxu0 0.0
    %133 = vmatprep.subr.mxu0 0.0
    %134 = vmatpush1.msra.mxu0 0.0
    %135 = vmatprep.subr.mxu0 0.0
    %136 = vmatpush1.msra.mxu0 0.0
    %137 = vmatprep.subr.mxu0 0.0
    %138 = vmatpush1.msra.mxu0 0.0
    %139 = vmatprep.subr.mxu0 0.0
    %140 = vmatpush1.msra.mxu0 0.0
    %141 = vmatprep.subr.mxu0 0.0
    %142 = vmatpush1.msra.mxu0 0.0
    %143 = vmatprep.subr.mxu0 0.0
    %144 = vmatpush1.msra.mxu0 0.0
    %145 = vmatprep.subr.mxu0 0.0
    %146 = vmatpush1.msra.mxu0 0.0
    %147 = vmatprep.subr.mxu0 0.0
    %148 = vmatpush1.msra.mxu0 0.0
    %149 = vmatprep.subr.mxu0 0.0
    %150 = vmatpush1.msra.mxu0 0.0
    %151 = vmatprep.subr.mxu0 0.0
    %152 = vmatpush1.msra.mxu0 0.0
    %153 = vmatprep.subr.mxu0 0.0
    %154 = vmatpush1.msra.mxu0 0.0
    %155 = vmatprep.subr.mxu0 0.0
    %156 = vmatpush1.msra.mxu0 0.0
    %157 = vmatprep.mubr.f32.mxu0 0.0
    %158 = vmatmul.mubr.f32.gmra.mrb[0].mxu0 %v88
    %v159 = vpop.f32.mrb[0].mxu0
    %v160 = vadd.f32 %v84, %v159
    %v161 = vpop.f32.mrb[0].mxu0
    %162 = vmatprep.mubr.f32.mxu0 0.0
    %163 = vmatmul.mubr.f32.gmra.mrb[0].mxu0 %v91
    %v164 = vpop.f32.mrb[0].mxu0
    %v165 = vadd.f32 %v84, %v164
    %v166 = vpop.f32.mrb[0].mxu0
    %167 = vdwg.mxu0
    %v168 = vtanh.pop %v160
    %v169 = vtanh.pop %v165
    %v171 = vlaneseq
    %v172 = vshrl.u32 %v171, 7
    %v173 = vsub.s32 0, %v172
    %v174 = vrot.slane %v68, %v173
    %v177 = vsel %vm86, %v168, 0
    %v180 = vsel %vm86, %v169, 0
    %182 = vmatprep.subr.mxu0 0.0
    %183 = vmatpush1.msra.mxu0 %v64
    %184 = vmatprep.subr.mxu0 0.0
    %185 = vmatpush1.msra.mxu0 %v65
    %186 = vmatprep.subr.mxu0 0.0
    %187 = vmatpush1.msra.mxu0 %v66
    %188 = vmatprep.subr.mxu0 0.0
    %189 = vmatpush1.msra.mxu0 %v67
    %190 = vmatprep.subr.mxu0 0.0
    %191 = vmatpush1.msra.mxu0 0.0
    %192 = vmatprep.subr.mxu0 0.0
    %193 = vmatpush1.msra.mxu0 0.0
    %194 = vmatprep.subr.mxu0 0.0
    %195 = vmatpush1.msra.mxu0 0.0
    %196 = vmatprep.subr.mxu0 0.0
    %197 = vmatpush1.msra.mxu0 0.0
    %198 = vmatprep.subr.mxu0 0.0
    %199 = vmatpush1.msra.mxu0 0.0
    %200 = vmatprep.subr.mxu0 0.0
    %201 = vmatpush1.msra.mxu0 0.0
    %202 = vmatprep.subr.mxu0 0.0
    %203 = vmatpush1.msra.mxu0 0.0
    %204 = vmatprep.subr.mxu0 0.0
    %205 = vmatpush1.msra.mxu0 0.0
    %206 = vmatprep.subr.mxu0 0.0
    %207 = vmatpush1.msra.mxu0 0.0
    %208 = vmatprep.subr.mxu0 0.0
    %209 = vmatpush1.msra.mxu0 0.0
    %210 = vmatprep.subr.mxu0 0.0
    %211 = vmatpush1.msra.mxu0 0.0
    %212 = vmatprep.subr.mxu0 0.0
    %213 = vmatpush1.msra.mxu0 0.0
    %214 = vmatprep.subr.mxu0 0.0
    %215 = vmatpush1.msra.mxu0 0.0
    %216 = vmatprep.subr.mxu0 0.0
    %217 = vmatpush1.msra.mxu0 0.0
    %218 = vmatprep.subr.mxu0 0.0
    %219 = vmatpush1.msra.mxu0 0.0
    %220 = vmatprep.subr.mxu0 0.0
    %221 = vmatpush1.msra.mxu0 0.0
    %222 = vmatprep.subr.mxu0 0.0
    %223 = vmatpush1.msra.mxu0 0.0
    %224 = vmatprep.subr.mxu0 0.0
    %225 = vmatpush1.msra.mxu0 0.0
    %226 = vmatprep.subr.mxu0 0.0
    %227 = vmatpush1.msra.mxu0 0.0
    %228 = vmatprep.subr.mxu0 0.0
    %229 = vmatpush1.msra.mxu0 0.0
    %230 = vmatprep.subr.mxu0 0.0
    %231 = vmatpush1.msra.mxu0 0.0
    %232 = vmatprep.subr.mxu0 0.0
    %233 = vmatpush1.msra.mxu0 0.0
    %234 = vmatprep.subr.mxu0 0.0
    %235 = vmatpush1.msra.mxu0 0.0
    %236 = vmatprep.subr.mxu0 0.0
    %237 = vmatpush1.msra.mxu0 0.0
    %238 = vmatprep.subr.mxu0 0.0
    %239 = vmatpush1.msra.mxu0 0.0
    %240 = vmatprep.subr.mxu0 0.0
    %241 = vmatpush1.msra.mxu0 0.0
    %242 = vmatprep.subr.mxu0 0.0
    %243 = vmatpush1.msra.mxu0 0.0
    %244 = vmatprep.subr.mxu0 0.0
    %245 = vmatpush1.msra.mxu0 0.0
    %246 = vmatprep.mubr.f32.mxu0 0.0
    %247 = vmatmul.mubr.f32.gmra.mrb[0].mxu0 %v177
    %v248 = vpop.f32.mrb[0].mxu0
    %v249 = vadd.f32 %v174, %v248
    %v250 = vpop.f32.mrb[0].mxu0
    %251 = vmatprep.mubr.f32.mxu0 0.0
    %252 = vmatmul.mubr.f32.gmra.mrb[0].mxu0 %v180
    %v253 = vpop.f32.mrb[0].mxu0
    %v254 = vadd.f32 %v174, %v253
    %v255 = vpop.f32.mrb[0].mxu0
    %256 = vdwg.mxu0
    %v257 = vld [vmem:[#allocation2] sm:$0xff]
    %v258 = vld [vmem:[#allocation2 + $0x8] sm:$0xff]
    %v259 = vld [vmem:[%s3] sm:$0x1]
    %v260 = vld [vmem:[%s8] sm:$0xff]
    %v261 = vld [vmem:[%s8 + $0x8] sm:$0xff]
    %v262 = vld [vmem:[%s8 + $0x10] sm:$0xff]
    %v263 = vld [vmem:[%s9] sm:$0x1]
    %v264 = vld [vmem:[%s10] sm:$0xff]
    %v265 = vld [vmem:[%s10 + $0x8] sm:$0xff]
    %v266 = vld [vmem:[%s10 + $0x10] sm:$0xff]
    %v267 = vld [vmem:[%s10 + $0x18] sm:$0xff]
    %v268 = vld [vmem:[%s11] sm:$0x1]
    %v269 = vadd.f32 %v259, 0.5
    %v270 = vmax.f32 %v269, 0.0
    %v271 = vmin.f32 %v270, 1.0
    %v273 = vlaneseq
    %v274 = vshrl.u32 %v273, 7
    %v275 = vsub.s32 0, %v274
    %v276 = vrot.slane %v271, %v275
    %v278 = vmul.f32 %v257, %v276
    %v279 = vmul.f32 %v258, %v276
    %v281 = vlaneseq
    %v282 = vshrl.u32 %v281, 7
    %v283 = vsub.s32 0, %v282
    %v284 = vrot.slane %v263, %v283
    %vm286 = vcmask 195584
    %v288 = vsel %vm286, %v278, 0
    %v291 = vsel %vm286, %v279, 0
    %293 = vmatprep.subr.mxu0 0.0
    %294 = vmatpush1.msra.mxu0 %v260
    %295 = vmatprep.subr.mxu0 0.0
    %296 = vmatpush1.msra.mxu0 %v261
    %297 = vmatprep.subr.mxu0 0.0
    %298 = vmatpush1.msra.mxu0 %v262
    %299 = vmatprep.subr.mxu0 0.0
    %300 = vmatpush1.msra.mxu0 0.0
    %301 = vmatprep.subr.mxu0 0.0
    %302 = vmatpush1.msra.mxu0 0.0
    %303 = vmatprep.subr.mxu0 0.0
    %304 = vmatpush1.msra.mxu0 0.0
    %305 = vmatprep.subr.mxu0 0.0
    %306 = vmatpush1.msra.mxu0 0.0
    %307 = vmatprep.subr.mxu0 0.0
    %308 = vmatpush1.msra.mxu0 0.0
    %309 = vmatprep.subr.mxu0 0.0
    %310 = vmatpush1.msra.mxu0 0.0
    %311 = vmatprep.subr.mxu0 0.0
    %312 = vmatpush1.msra.mxu0 0.0
    %313 = vmatprep.subr.mxu0 0.0
    %314 = vmatpush1.msra.mxu0 0.0
    %315 = vmatprep.subr.mxu0 0.0
    %316 = vmatpush1.msra.mxu0 0.0
    %317 = vmatprep.subr.mxu0 0.0
    %318 = vmatpush1.msra.mxu0 0.0
    %319 = vmatprep.subr.mxu0 0.0
    %320 = vmatpush1.msra.mxu0 0.0
    %321 = vmatprep.subr.mxu0 0.0
    %322 = vmatpush1.msra.mxu0 0.0
    %323 = vmatprep.subr.mxu0 0.0
    %324 = vmatpush1.msra.mxu0 0.0
    %325 = vmatprep.subr.mxu0 0.0
    %326 = vmatpush1.msra.mxu0 0.0
    %327 = vmatprep.subr.mxu0 0.0
    %328 = vmatpush1.msra.mxu0 0.0
    %329 = vmatprep.subr.mxu0 0.0
    %330 = vmatpush1.msra.mxu0 0.0
    %331 = vmatprep.subr.mxu0 0.0
    %332 = vmatpush1.msra.mxu0 0.0
    %333 = vmatprep.subr.mxu0 0.0
    %334 = vmatpush1.msra.mxu0 0.0
    %335 = vmatprep.subr.mxu0 0.0
    %336 = vmatpush1.msra.mxu0 0.0
    %337 = vmatprep.subr.mxu0 0.0
    %338 = vmatpush1.msra.mxu0 0.0
    %339 = vmatprep.subr.mxu0 0.0
    %340 = vmatpush1.msra.mxu0 0.0
    %341 = vmatprep.subr.mxu0 0.0
    %342 = vmatpush1.msra.mxu0 0.0
    %343 = vmatprep.subr.mxu0 0.0
    %344 = vmatpush1.msra.mxu0 0.0
    %345 = vmatprep.subr.mxu0 0.0
    %346 = vmatpush1.msra.mxu0 0.0
    %347 = vmatprep.subr.mxu0 0.0
    %348 = vmatpush1.msra.mxu0 0.0
    %349 = vmatprep.subr.mxu0 0.0
    %350 = vmatpush1.msra.mxu0 0.0
    %351 = vmatprep.subr.mxu0 0.0
    %352 = vmatpush1.msra.mxu0 0.0
    %353 = vmatprep.subr.mxu0 0.0
    %354 = vmatpush1.msra.mxu0 0.0
    %355 = vmatprep.subr.mxu0 0.0
    %356 = vmatpush1.msra.mxu0 0.0
    %357 = vmatprep.mubr.f32.mxu0 0.0
    %358 = vmatmul.mubr.f32.gmra.mrb[0].mxu0 %v288
    %v359 = vpop.f32.mrb[0].mxu0
    %v360 = vadd.f32 %v284, %v359
    %v361 = vpop.f32.mrb[0].mxu0
    %362 = vmatprep.mubr.f32.mxu0 0.0
    %363 = vmatmul.mubr.f32.gmra.mrb[0].mxu0 %v291
    %v364 = vpop.f32.mrb[0].mxu0
    %v365 = vadd.f32 %v284, %v364
    %v366 = vpop.f32.mrb[0].mxu0
    %367 = vdwg.mxu0
    %v368 = vtanh.pop %v360
    %v369 = vtanh.pop %v365
    %v371 = vlaneseq
    %v372 = vshrl.u32 %v371, 7
    %v373 = vsub.s32 0, %v372
    %v374 = vrot.slane %v268, %v373
    %v377 = vsel %vm86, %v368, 0
    %v380 = vsel %vm86, %v369, 0
    %382 = vmatprep.subr.mxu0 0.0
    %383 = vmatpush1.msra.mxu0 %v264
    %384 = vmatprep.subr.mxu0 0.0
    %385 = vmatpush1.msra.mxu0 %v265
    %386 = vmatprep.subr.mxu0 0.0
    %387 = vmatpush1.msra.mxu0 %v266
    %388 = vmatprep.subr.mxu0 0.0
    %389 = vmatpush1.msra.mxu0 %v267
    %390 = vmatprep.subr.mxu0 0.0
    %391 = vmatpush1.msra.mxu0 0.0
    %392 = vmatprep.subr.mxu0 0.0
    %393 = vmatpush1.msra.mxu0 0.0
    %394 = vmatprep.subr.mxu0 0.0
    %395 = vmatpush1.msra.mxu0 0.0
    %396 = vmatprep.subr.mxu0 0.0
    %397 = vmatpush1.msra.mxu0 0.0
    %398 = vmatprep.subr.mxu0 0.0
    %399 = vmatpush1.msra.mxu0 0.0
    %400 = vmatprep.subr.mxu0 0.0
    %401 = vmatpush1.msra.mxu0 0.0
    %402 = vmatprep.subr.mxu0 0.0
    %403 = vmatpush1.msra.mxu0 0.0
    %404 = vmatprep.subr.mxu0 0.0
    %405 = vmatpush1.msra.mxu0 0.0
    %406 = vmatprep.subr.mxu0 0.0
    %407 = vmatpush1.msra.mxu0 0.0
    %408 = vmatprep.subr.mxu0 0.0
    %409 = vmatpush1.msra.mxu0 0.0
    %410 = vmatprep.subr.mxu0 0.0
    %411 = vmatpush1.msra.mxu0 0.0
    %412 = vmatprep.subr.mxu0 0.0
    %413 = vmatpush1.msra.mxu0 0.0
    %414 = vmatprep.subr.mxu0 0.0
    %415 = vmatpush1.msra.mxu0 0.0
    %416 = vmatprep.subr.mxu0 0.0
    %417 = vmatpush1.msra.mxu0 0.0
    %418 = vmatprep.subr.mxu0 0.0
    %419 = vmatpush1.msra.mxu0 0.0
    %420 = vmatprep.subr.mxu0 0.0
    %421 = vmatpush1.msra.mxu0 0.0
    %422 = vmatprep.subr.mxu0 0.0
    %423 = vmatpush1.msra.mxu0 0.0
    %424 = vmatprep.subr.mxu0 0.0
    %425 = vmatpush1.msra.mxu0 0.0
    %426 = vmatprep.subr.mxu0 0.0
    %427 = vmatpush1.msra.mxu0 0.0
    %428 = vmatprep.subr.mxu0 0.0
    %429 = vmatpush1.msra.mxu0 0.0
    %430 = vmatprep.subr.mxu0 0.0
    %431 = vmatpush1.msra.mxu0 0.0
    %432 = vmatprep.subr.mxu0 0.0
    %433 = vmatpush1.msra.mxu0 0.0
    %434 = vmatprep.subr.mxu0 0.0
    %435 = vmatpush1.msra.mxu0 0.0
    %436 = vmatprep.subr.mxu0 0.0
    %437 = vmatpush1.msra.mxu0 0.0
    %438 = vmatprep.subr.mxu0 0.0
    %439 = vmatpush1.msra.mxu0 0.0
    %440 = vmatprep.subr.mxu0 0.0
    %441 = vmatpush1.msra.mxu0 0.0
    %442 = vmatprep.subr.mxu0 0.0
    %443 = vmatpush1.msra.mxu0 0.0
    %444 = vmatprep.subr.mxu0 0.0
    %445 = vmatpush1.msra.mxu0 0.0
    %446 = vmatprep.mubr.f32.mxu0 0.0
    %447 = vmatmul.mubr.f32.gmra.mrb[0].mxu0 %v377
    %v448 = vpop.f32.mrb[0].mxu0
    %v449 = vadd.f32 %v374, %v448
    %v450 = vpop.f32.mrb[0].mxu0
    %451 = vmatprep.mubr.f32.mxu0 0.0
    %452 = vmatmul.mubr.f32.gmra.mrb[0].mxu0 %v380
    %v453 = vpop.f32.mrb[0].mxu0
    %v454 = vadd.f32 %v374, %v453
    %v455 = vpop.f32.mrb[0].mxu0
    %456 = vdwg.mxu0
    %vm457 = vcmask 64512
    %v458 = vsel %vm457, %v249, 0.0
    %v459 = vsel %vm457, %v254, 0.0
    %v460 = vadd.f32 %v458, %v459
    %v461 = vrot.slane %v460, 4
    %v462 = vadd.f32 %v460, %v461
    %v463 = vrot.slane %v462, 2
    %v464 = vadd.f32 %v462, %v463
    %v465 = vrot.slane %v464, 1
    %v466 = vadd.f32 %v464, %v465
    %v467 = vrcp.pop 16.0
    %v468 = vmul.f32 %v466, %v467
    %v469 = vsub.f32 %v249, %v468
    %v470 = vsub.f32 %v254, %v468
    %v471 = vsel %vm457, %v449, 0.0
    %v472 = vsel %vm457, %v454, 0.0
    %v473 = vadd.f32 %v471, %v472
    %v474 = vrot.slane %v473, 4
    %v475 = vadd.f32 %v473, %v474
    %v476 = vrot.slane %v475, 2
    %v477 = vadd.f32 %v475, %v476
    %v478 = vrot.slane %v477, 1
    %v479 = vadd.f32 %v477, %v478
    %v480 = vmul.f32 %v479, %v467
    %v481 = vsub.f32 %v449, %v480
    %v482 = vsub.f32 %v454, %v480
    %483 = vxpose.xlu0.b32.start [1/16] %v469, 128
    %484 = vxpose.xlu0.b32.cont [2/16] %v470, 128
    %485 = vxpose.xlu0.b32.cont [3/16] 0.0, 128
    %486 = vxpose.xlu0.b32.cont [4/16] 0.0, 128
    %487 = vxpose.xlu0.b32.cont [5/16] 0.0, 128
    %488 = vxpose.xlu0.b32.cont [6/16] 0.0, 128
    %489 = vxpose.xlu0.b32.cont [7/16] 0.0, 128
    %490 = vxpose.xlu0.b32.cont [8/16] 0.0, 128
    %491 = vxpose.xlu0.b32.cont [9/16] 0.0, 128
    %492 = vxpose.xlu0.b32.cont [10/16] 0.0, 128
    %493 = vxpose.xlu0.b32.cont [11/16] 0.0, 128
    %494 = vxpose.xlu0.b32.cont [12/16] 0.0, 128
    %495 = vxpose.xlu0.b32.cont [13/16] 0.0, 128
    %496 = vxpose.xlu0.b32.cont [14/16] 0.0, 128
    %497 = vxpose.xlu0.b32.cont [15/16] 0.0, 128
    %498 = vxpose.xlu0.b32.end [16/16] 0.0, 128
    %v499 = vpop.trf.xlu0
    %v500 = vpop.trf.xlu0
    %v501 = vpop.trf.xlu0
    %v502 = vpop.trf.xlu0
    %v503 = vpop.trf.xlu0
    %v504 = vpop.trf.xlu0
    %v505 = vpop.trf.xlu0
    %v506 = vpop.trf.xlu0
    %v507 = vpop.trf.xlu0
    %v508 = vpop.trf.xlu0
    %v509 = vpop.trf.xlu0
    %v510 = vpop.trf.xlu0
    %v511 = vpop.trf.xlu0
    %v512 = vpop.trf.xlu0
    %v513 = vpop.trf.xlu0
    %v514 = vpop.trf.xlu0
    %vm515 = vcmask 130048
    %v517 = vsel %vm515, %v499, 0
    %519 = vmatprep.subr.mxu0 0.0
    %520 = vmatpush1.msra.mxu0 %v469
    %521 = vmatprep.subr.mxu0 0.0
    %522 = vmatpush1.msra.mxu0 %v470
    %523 = vmatprep.subr.mxu0 0.0
    %524 = vmatpush1.msra.mxu0 0.0
    %525 = vmatprep.subr.mxu0 0.0
    %526 = vmatpush1.msra.mxu0 0.0
    %527 = vmatprep.subr.mxu0 0.0
    %528 = vmatpush1.msra.mxu0 0.0
    %529 = vmatprep.subr.mxu0 0.0
    %530 = vmatpush1.msra.mxu0 0.0
    %531 = vmatprep.subr.mxu0 0.0
    %532 = vmatpush1.msra.mxu0 0.0
    %533 = vmatprep.subr.mxu0 0.0
    %534 = vmatpush1.msra.mxu0 0.0
    %535 = vmatprep.subr.mxu0 0.0
    %536 = vmatpush1.msra.mxu0 0.0
    %537 = vmatprep.subr.mxu0 0.0
    %538 = vmatpush1.msra.mxu0 0.0
    %539 = vmatprep.subr.mxu0 0.0
    %540 = vmatpush1.msra.mxu0 0.0
    %541 = vmatprep.subr.mxu0 0.0
    %542 = vmatpush1.msra.mxu0 0.0
    %543 = vmatprep.subr.mxu0 0.0
    %544 = vmatpush1.msra.mxu0 0.0
    %545 = vmatprep.subr.mxu0 0.0
    %546 = vmatpush1.msra.mxu0 0.0
    %547 = vmatprep.subr.mxu0 0.0
    %548 = vmatpush1.msra.mxu0 0.0
    %549 = vmatprep.subr.mxu0 0.0
    %550 = vmatpush1.msra.mxu0 0.0
    %551 = vmatprep.subr.mxu0 0.0
    %552 = vmatpush1.msra.mxu0 0.0
    %553 = vmatprep.subr.mxu0 0.0
    %554 = vmatpush1.msra.mxu0 0.0
    %555 = vmatprep.subr.mxu0 0.0
    %556 = vmatpush1.msra.mxu0 0.0
    %557 = vmatprep.subr.mxu0 0.0
    %558 = vmatpush1.msra.mxu0 0.0
    %559 = vmatprep.subr.mxu0 0.0
    %560 = vmatpush1.msra.mxu0 0.0
    %561 = vmatprep.subr.mxu0 0.0
    %562 = vmatpush1.msra.mxu0 0.0
    %563 = vmatprep.subr.mxu0 0.0
    %564 = vmatpush1.msra.mxu0 0.0
    %565 = vmatprep.subr.mxu0 0.0
    %566 = vmatpush1.msra.mxu0 0.0
    %567 = vmatprep.subr.mxu0 0.0
    %568 = vmatpush1.msra.mxu0 0.0
    %569 = vmatprep.subr.mxu0 0.0
    %570 = vmatpush1.msra.mxu0 0.0
    %571 = vmatprep.subr.mxu0 0.0
    %572 = vmatpush1.msra.mxu0 0.0
    %573 = vmatprep.subr.mxu0 0.0
    %574 = vmatpush1.msra.mxu0 0.0
    %575 = vmatprep.subr.mxu0 0.0
    %576 = vmatpush1.msra.mxu0 0.0
    %577 = vmatprep.subr.mxu0 0.0
    %578 = vmatpush1.msra.mxu0 0.0
    %579 = vmatprep.subr.mxu0 0.0
    %580 = vmatpush1.msra.mxu0 0.0
    %581 = vmatprep.subr.mxu0 0.0
    %582 = vmatpush1.msra.mxu0 0.0
    %583 = vmatprep.mubr.f32.mxu0 0.0
    %584 = vmatmul.mubr.f32.gmra.mrb[0].mxu0 %v517
    %v585 = vpop.f32.mrb[0].mxu0
    %v586 = vadd.f32 0.0, %v585
    %v587 = vpop.f32.mrb[0].mxu0
    %588 = vdwg.mxu0
    %v589 = vmul.f32 %v586, 0.06666667
    %590 = vst.msk [vmem:[#allocation5] sm:$0xff] %vm457, %v589
    %591 = vxpose.xlu0.b32.start [1/16] %v481, 128
    %592 = vxpose.xlu0.b32.cont [2/16] %v482, 128
    %593 = vxpose.xlu0.b32.cont [3/16] 0.0, 128
    %594 = vxpose.xlu0.b32.cont [4/16] 0.0, 128
    %595 = vxpose.xlu0.b32.cont [5/16] 0.0, 128
    %596 = vxpose.xlu0.b32.cont [6/16] 0.0, 128
    %597 = vxpose.xlu0.b32.cont [7/16] 0.0, 128
    %598 = vxpose.xlu0.b32.cont [8/16] 0.0, 128
    %599 = vxpose.xlu0.b32.cont [9/16] 0.0, 128
    %600 = vxpose.xlu0.b32.cont [10/16] 0.0, 128
    %601 = vxpose.xlu0.b32.cont [11/16] 0.0, 128
    %602 = vxpose.xlu0.b32.cont [12/16] 0.0, 128
    %603 = vxpose.xlu0.b32.cont [13/16] 0.0, 128
    %604 = vxpose.xlu0.b32.cont [14/16] 0.0, 128
    %605 = vxpose.xlu0.b32.cont [15/16] 0.0, 128
    %606 = vxpose.xlu0.b32.end [16/16] 0.0, 128
    %v607 = vpop.trf.xlu0
    %v608 = vpop.trf.xlu0
    %v609 = vpop.trf.xlu0
    %v610 = vpop.trf.xlu0
    %v611 = vpop.trf.xlu0
    %v612 = vpop.trf.xlu0
    %v613 = vpop.trf.xlu0
    %v614 = vpop.trf.xlu0
    %v615 = vpop.trf.xlu0
    %v616 = vpop.trf.xlu0
    %v617 = vpop.trf.xlu0
    %v618 = vpop.trf.xlu0
    %v619 = vpop.trf.xlu0
    %v620 = vpop.trf.xlu0
    %v621 = vpop.trf.xlu0
    %v622 = vpop.trf.xlu0
    %v624 = vsel %vm515, %v607, 0
    %626 = vmatprep.subr.mxu0 0.0
    %627 = vmatpush1.msra.mxu0 %v481
    %628 = vmatprep.subr.mxu0 0.0
    %629 = vmatpush1.msra.mxu0 %v482
    %630 = vmatprep.subr.mxu0 0.0
    %631 = vmatpush1.msra.mxu0 0.0
    %632 = vmatprep.subr.mxu0 0.0
    %633 = vmatpush1.msra.mxu0 0.0
    %634 = vmatprep.subr.mxu0 0.0
    %635 = vmatpush1.msra.mxu0 0.0
    %636 = vmatprep.subr.mxu0 0.0
    %637 = vmatpush1.msra.mxu0 0.0
    %638 = vmatprep.subr.mxu0 0.0
    %639 = vmatpush1.msra.mxu0 0.0
    %640 = vmatprep.subr.mxu0 0.0
    %641 = vmatpush1.msra.mxu0 0.0
    %642 = vmatprep.subr.mxu0 0.0
    %643 = vmatpush1.msra.mxu0 0.0
    %644 = vmatprep.subr.mxu0 0.0
    %645 = vmatpush1.msra.mxu0 0.0
    %646 = vmatprep.subr.mxu0 0.0
    %647 = vmatpush1.msra.mxu0 0.0
    %648 = vmatprep.subr.mxu0 0.0
    %649 = vmatpush1.msra.mxu0 0.0
    %650 = vmatprep.subr.mxu0 0.0
    %651 = vmatpush1.msra.mxu0 0.0
    %652 = vmatprep.subr.mxu0 0.0
    %653 = vmatpush1.msra.mxu0 0.0
    %654 = vmatprep.subr.mxu0 0.0
    %655 = vmatpush1.msra.mxu0 0.0
    %656 = vmatprep.subr.mxu0 0.0
    %657 = vmatpush1.msra.mxu0 0.0
    %658 = vmatprep.subr.mxu0 0.0
    %659 = vmatpush1.msra.mxu0 0.0
    %660 = vmatprep.subr.mxu0 0.0
    %661 = vmatpush1.msra.mxu0 0.0
    %662 = vmatprep.subr.mxu0 0.0
    %663 = vmatpush1.msra.mxu0 0.0
    %664 = vmatprep.subr.mxu0 0.0
    %665 = vmatpush1.msra.mxu0 0.0
    %666 = vmatprep.subr.mxu0 0.0
    %667 = vmatpush1.msra.mxu0 0.0
    %668 = vmatprep.subr.mxu0 0.0
    %669 = vmatpush1.msra.mxu0 0.0
    %670 = vmatprep.subr.mxu0 0.0
    %671 = vmatpush1.msra.mxu0 0.0
    %672 = vmatprep.subr.mxu0 0.0
    %673 = vmatpush1.msra.mxu0 0.0
    %674 = vmatprep.subr.mxu0 0.0
    %675 = vmatpush1.msra.mxu0 0.0
    %676 = vmatprep.subr.mxu0 0.0
    %677 = vmatpush1.msra.mxu0 0.0
    %678 = vmatprep.subr.mxu0 0.0
    %679 = vmatpush1.msra.mxu0 0.0
    %680 = vmatprep.subr.mxu0 0.0
    %681 = vmatpush1.msra.mxu0 0.0
    %682 = vmatprep.subr.mxu0 0.0
    %683 = vmatpush1.msra.mxu0 0.0
    %684 = vmatprep.subr.mxu0 0.0
    %685 = vmatpush1.msra.mxu0 0.0
    %686 = vmatprep.subr.mxu0 0.0
    %687 = vmatpush1.msra.mxu0 0.0
    %688 = vmatprep.subr.mxu0 0.0
    %689 = vmatpush1.msra.mxu0 0.0
    %690 = vmatprep.mubr.f32.mxu0 0.0
    %691 = vmatmul.mubr.f32.gmra.mrb[0].mxu0 %v624
    %v692 = vpop.f32.mrb[0].mxu0
    %v693 = vadd.f32 0.0, %v692
    %v694 = vpop.f32.mrb[0].mxu0
    %695 = vdwg.mxu0
    %v696 = vmul.f32 %v693, 0.06666667
    %698 = vrot.lane.b32.xlu0 %v696, 8
    %v699 = vpop.permute.xlu0 %698
    %vm701 = vcmask 130112
    %702 = vst.msk [vmem:[#allocation5] sm:$0xff] %vm701, %v699
    %703 = vmatprep.subr.mxu0 0.0
    %704 = vmatpush1.msra.mxu0 %v481
    %705 = vmatprep.subr.mxu0 0.0
    %706 = vmatpush1.msra.mxu0 %v482
    %707 = vmatprep.subr.mxu0 0.0
    %708 = vmatpush1.msra.mxu0 0.0
    %709 = vmatprep.subr.mxu0 0.0
    %710 = vmatpush1.msra.mxu0 0.0
    %711 = vmatprep.subr.mxu0 0.0
    %712 = vmatpush1.msra.mxu0 0.0
    %713 = vmatprep.subr.mxu0 0.0
    %714 = vmatpush1.msra.mxu0 0.0
    %715 = vmatprep.subr.mxu0 0.0
    %716 = vmatpush1.msra.mxu0 0.0
    %717 = vmatprep.subr.mxu0 0.0
    %718 = vmatpush1.msra.mxu0 0.0
    %719 = vmatprep.subr.mxu0 0.0
    %720 = vmatpush1.msra.mxu0 0.0
    %721 = vmatprep.subr.mxu0 0.0
    %722 = vmatpush1.msra.mxu0 0.0
    %723 = vmatprep.subr.mxu0 0.0
    %724 = vmatpush1.msra.mxu0 0.0
    %725 = vmatprep.subr.mxu0 0.0
    %726 = vmatpush1.msra.mxu0 0.0
    %727 = vmatprep.subr.mxu0 0.0
    %728 = vmatpush1.msra.mxu0 0.0
    %729 = vmatprep.subr.mxu0 0.0
    %730 = vmatpush1.msra.mxu0 0.0
    %731 = vmatprep.subr.mxu0 0.0
    %732 = vmatpush1.msra.mxu0 0.0
    %733 = vmatprep.subr.mxu0 0.0
    %734 = vmatpush1.msra.mxu0 0.0
    %735 = vmatprep.subr.mxu0 0.0
    %736 = vmatpush1.msra.mxu0 0.0
    %737 = vmatprep.subr.mxu0 0.0
    %738 = vmatpush1.msra.mxu0 0.0
    %739 = vmatprep.subr.mxu0 0.0
    %740 = vmatpush1.msra.mxu0 0.0
    %741 = vmatprep.subr.mxu0 0.0
    %742 = vmatpush1.msra.mxu0 0.0
    %743 = vmatprep.subr.mxu0 0.0
    %744 = vmatpush1.msra.mxu0 0.0
    %745 = vmatprep.subr.mxu0 0.0
    %746 = vmatpush1.msra.mxu0 0.0
    %747 = vmatprep.subr.mxu0 0.0
    %748 = vmatpush1.msra.mxu0 0.0
    %749 = vmatprep.subr.mxu0 0.0
    %750 = vmatpush1.msra.mxu0 0.0
    %751 = vmatprep.subr.mxu0 0.0
    %752 = vmatpush1.msra.mxu0 0.0
    %753 = vmatprep.subr.mxu0 0.0
    %754 = vmatpush1.msra.mxu0 0.0
    %755 = vmatprep.subr.mxu0 0.0
    %756 = vmatpush1.msra.mxu0 0.0
    %757 = vmatprep.subr.mxu0 0.0
    %758 = vmatpush1.msra.mxu0 0.0
    %759 = vmatprep.subr.mxu0 0.0
    %760 = vmatpush1.msra.mxu0 0.0
    %761 = vmatprep.subr.mxu0 0.0
    %762 = vmatpush1.msra.mxu0 0.0
    %763 = vmatprep.subr.mxu0 0.0
    %764 = vmatpush1.msra.mxu0 0.0
    %765 = vmatprep.subr.mxu0 0.0
    %766 = vmatpush1.msra.mxu0 0.0
    %767 = vmatprep.mubr.f32.mxu0 0.0
    %768 = vmatmul.mubr.f32.gmra.mrb[0].mxu0 %v517
    %v769 = vpop.f32.mrb[0].mxu0
    %v770 = vadd.f32 0.0, %v769
    %v771 = vpop.f32.mrb[0].mxu0
    %772 = vdwg.mxu0
    %v773 = vmul.f32 %v770, 0.06666667
    %775 = vrot.lane.b32.xlu0 %v773, 16
    %v776 = vpop.permute.xlu0 %775
    %vm778 = vcmask 195712
    %779 = vst.msk [vmem:[#allocation5] sm:$0xff] %vm778, %v776
    // Predicated region
    $region54: #{tpu_custom_call.1} parent=1 // pred_check
      _
    $region55: #{tpu_custom_call.1} parent=1 // pred_check_branch
      %781 = sbr.rel (0) target = $region57
    $region56: #{tpu_custom_call.1} parent=1 // pred_region
      %s783 = ssub.s32 128, 128
      %784 = vsyncadd [#allocation4], %s783
      %s786 = sshll.u32 [#allocation5], 4
      %s787 = int_to_ptr.vmem [resolvable:$true] %s786
      %789 = dma.vmem_to_hbm [thread:$0]  %s787, 128, %s12, [#allocation4]
    $region57: #{tpu_custom_call.1} parent=1 // pred_fallthru
      _
    // Predicated region
    $region58: #{tpu_custom_call.1} parent=1 // pred_check
      _
    $region59: #{tpu_custom_call.1} parent=1 // pred_check_branch
      %791 = sbr.rel (0) target = $region61
    $region60: #{tpu_custom_call.1} parent=1 // pred_region
      %792 = dma.done [#allocation4], 128
    $region61: #{tpu_custom_call.1} parent=1 // pred_fallthru
      _
    %793 = vsyncpa [#allocation3], 1
    %794 = vsyncpa [#allocation4], 1

</llo_original>
